<compile_context>
chip_gen: v5e
topology: v5e:2x2
jax: 0.10.0
libtpu: 0.0.40
codegen_flags: <defaults>
</compile_context>

<pallas_src>
import functools
import math

import jax
import jax.numpy as jnp
from jax import lax
from jax.experimental import pallas as pl
from jax.experimental.pallas import tpu as pltpu


# ----------------------------------------------------------------------------
# helpers
# ----------------------------------------------------------------------------
def _row_tile(m, target=512):
    """Largest row tile <= target that divides m and is a multiple of 8."""
    if m <= target:
        return m
    for t in range(min(target, m), 7, -1):
        if m % t == 0 and t % 8 == 0:
            return t
    return m


# ----------------------------------------------------------------------------
# linear (+ optional activation):  y = act(x @ w + b)
# ----------------------------------------------------------------------------
def _linear_kernel(x_ref, w_ref, b_ref, o_ref, *, activation):
    y = jnp.dot(x_ref[...], w_ref[...], preferred_element_type=jnp.float32)
    y = y + b_ref[...]
    if activation == "relu":
        y = jnp.maximum(y, 0.0)
    elif activation == "gelu":
        y = jax.nn.gelu(y)
    o_ref[...] = y


def _linear(x, w, b, activation=None):
    """x: (M, K) f32, w: (K, N) f32, b: (N,) f32 -> (M, N) f32."""
    M, K = x.shape
    N = w.shape[1]
    tm = _row_tile(M)
    kernel = functools.partial(_linear_kernel, activation=activation)
    return pl.pallas_call(
        kernel,
        out_shape=jax.ShapeDtypeStruct((M, N), jnp.float32),
        grid=(M // tm,),
        in_specs=[
            pl.BlockSpec((tm, K), lambda i: (i, 0)),      # x tile
            pl.BlockSpec((K, N), lambda i: (0, 0)),       # weight reused across tiles
            pl.BlockSpec((1, N), lambda i: (0, 0)),       # bias reused across tiles
        ],
        out_specs=pl.BlockSpec((tm, N), lambda i: (i, 0)),
        compiler_params=pltpu.CompilerParams(dimension_semantics=("parallel",)),
        cost_estimate=pl.CostEstimate(
            flops=2 * M * K * N,
            transcendentals=0,
            bytes_accessed=4 * (M * K + K * N + M * N)),
    )(x, w, b.reshape(1, N))


# ----------------------------------------------------------------------------
# multi-head attention core: one grid step per batch, all heads fused
# ----------------------------------------------------------------------------
def _attention_kernel(q_ref, k_ref, v_ref, bias_ref, o_ref, p_ref, *,
                      scale, nhead):
    bias = bias_ref[0]                                # (1, L) key-padding bias
    inv_h = 1.0 / nhead
    head_outs = []
    p_sum = None
    for h in range(nhead):                            # static loop; small H
        q = q_ref[0, h]                               # (L, dh)
        k = k_ref[0, h]                               # (L, dh)
        v = v_ref[0, h]                               # (L, dh)

        # scores = (q @ k^T) * scale + key_padding bias
        s = lax.dot_general(q, k, (((1,), (1,)), ((), ())),
                            preferred_element_type=jnp.float32) * scale
        s = s + bias                                  # broadcast over queries

        # softmax over keys
        s = s - jnp.max(s, axis=-1, keepdims=True)
        e = jnp.exp(s)
        p = e / jnp.sum(e, axis=-1, keepdims=True)    # (L, L)

        head_outs.append(jnp.dot(p, v, preferred_element_type=jnp.float32))
        p_sum = p if p_sum is None else p_sum + p

    # lane-dense head-concatenated output (L, E) and head-averaged attn map
    o_ref[0] = jnp.concatenate(head_outs, axis=-1)
    p_ref[0] = p_sum * inv_h


def _mha_attention(q, k, v, mask_bias):
    """q/k/v: (B, H, L, dh); mask_bias: (B, 1, L) additive bias (0 or -1e30).

    Returns (attn_out (B, L, H*dh), attn_map (B, L, L))."""
    B, H, L, dh = q.shape
    E = H * dh
    scale = 1.0 / math.sqrt(dh)
    kernel = functools.partial(_attention_kernel, scale=scale, nhead=H)
    out, attn = pl.pallas_call(
        kernel,
        out_shape=(jax.ShapeDtypeStruct((B, L, E), jnp.float32),
                   jax.ShapeDtypeStruct((B, L, L), jnp.float32)),
        grid=(B,),
        in_specs=[
            pl.BlockSpec((1, H, L, dh), lambda b: (b, 0, 0, 0)),
            pl.BlockSpec((1, H, L, dh), lambda b: (b, 0, 0, 0)),
            pl.BlockSpec((1, H, L, dh), lambda b: (b, 0, 0, 0)),
            pl.BlockSpec((1, 1, L), lambda b: (b, 0, 0)),   # mask per batch
        ],
        out_specs=(
            pl.BlockSpec((1, L, E), lambda b: (b, 0, 0)),
            pl.BlockSpec((1, L, L), lambda b: (b, 0, 0)),
        ),
        compiler_params=pltpu.CompilerParams(dimension_semantics=("parallel",)),
        cost_estimate=pl.CostEstimate(
            flops=4 * B * H * L * L * dh,
            transcendentals=B * H * L * L,
            bytes_accessed=4 * (3 * B * H * L * dh + B * L
                                + B * L * E + B * L * L)),
    )(q, k, v, mask_bias)
    return out, attn


# ----------------------------------------------------------------------------
# fused: out-proj + residual + LayerNorm
# ----------------------------------------------------------------------------
def _proj_residual_ln_kernel(a_ref, w_ref, b_ref, res_ref, g_ref, bt_ref, o_ref,
                             *, eps, apply_norm):
    z = (jnp.dot(a_ref[...], w_ref[...], preferred_element_type=jnp.float32)
         + b_ref[...] + res_ref[...])
    if apply_norm:
        mu = jnp.mean(z, axis=-1, keepdims=True)
        zc = z - mu
        var = jnp.mean(zc * zc, axis=-1, keepdims=True)
        z = zc * lax.rsqrt(var + eps) * g_ref[...] + bt_ref[...]
    o_ref[...] = z


def _proj_residual_ln(a, w, b, res, gamma, beta, *, apply_norm=True, eps=1e-5):
    M, K = a.shape
    N = w.shape[1]
    tm = _row_tile(M)
    kernel = functools.partial(_proj_residual_ln_kernel, eps=eps,
                               apply_norm=apply_norm)
    return pl.pallas_call(
        kernel,
        out_shape=jax.ShapeDtypeStruct((M, N), jnp.float32),
        grid=(M // tm,),
        in_specs=[
            pl.BlockSpec((tm, K), lambda i: (i, 0)),
            pl.BlockSpec((K, N), lambda i: (0, 0)),
            pl.BlockSpec((1, N), lambda i: (0, 0)),
            pl.BlockSpec((tm, N), lambda i: (i, 0)),
            pl.BlockSpec((1, N), lambda i: (0, 0)),
            pl.BlockSpec((1, N), lambda i: (0, 0)),
        ],
        out_specs=pl.BlockSpec((tm, N), lambda i: (i, 0)),
        compiler_params=pltpu.CompilerParams(dimension_semantics=("parallel",)),
        cost_estimate=pl.CostEstimate(
            flops=2 * M * K * N,
            transcendentals=0,
            bytes_accessed=4 * (M * K + K * N + 2 * M * N)),
    )(a, w, b.reshape(1, N), res, gamma.reshape(1, N), beta.reshape(1, N))


# ----------------------------------------------------------------------------
# fused: linear1 -> activation -> linear2 -> residual -> LayerNorm
# ----------------------------------------------------------------------------
def _ffn_residual_ln_kernel(x_ref, w1_ref, b1_ref, w2_ref, b2_ref, g_ref, bt_ref,
                            o_ref, *, eps, activation, apply_norm):
    x = x_ref[...]
    h = jnp.dot(x, w1_ref[...], preferred_element_type=jnp.float32) + b1_ref[...]
    if activation == "relu":
        h = jnp.maximum(h, 0.0)
    else:
        h = jax.nn.gelu(h)
    z = jnp.dot(h, w2_ref[...], preferred_element_type=jnp.float32) + b2_ref[...] + x
    if apply_norm:
        mu = jnp.mean(z, axis=-1, keepdims=True)
        zc = z - mu
        var = jnp.mean(zc * zc, axis=-1, keepdims=True)
        z = zc * lax.rsqrt(var + eps) * g_ref[...] + bt_ref[...]
    o_ref[...] = z


def _ffn_residual_ln(x, w1, b1, w2, b2, gamma, beta, *, activation="relu",
                     apply_norm=True, eps=1e-5):
    M, E = x.shape
    F = w1.shape[1]
    tm = _row_tile(M)
    kernel = functools.partial(_ffn_residual_ln_kernel, eps=eps,
                               activation=activation, apply_norm=apply_norm)
    return pl.pallas_call(
        kernel,
        out_shape=jax.ShapeDtypeStruct((M, E), jnp.float32),
        grid=(M // tm,),
        in_specs=[
            pl.BlockSpec((tm, E), lambda i: (i, 0)),
            pl.BlockSpec((E, F), lambda i: (0, 0)),
            pl.BlockSpec((1, F), lambda i: (0, 0)),
            pl.BlockSpec((F, E), lambda i: (0, 0)),
            pl.BlockSpec((1, E), lambda i: (0, 0)),
            pl.BlockSpec((1, E), lambda i: (0, 0)),
            pl.BlockSpec((1, E), lambda i: (0, 0)),
        ],
        out_specs=pl.BlockSpec((tm, E), lambda i: (i, 0)),
        compiler_params=pltpu.CompilerParams(dimension_semantics=("parallel",)),
        cost_estimate=pl.CostEstimate(
            flops=4 * M * E * F,
            transcendentals=0,
            bytes_accessed=4 * (3 * M * E + 2 * E * F)),
    )(x, w1, b1.reshape(1, F), w2, b2.reshape(1, E),
      gamma.reshape(1, E), beta.reshape(1, E))


# ----------------------------------------------------------------------------
# full layer forward
# ----------------------------------------------------------------------------
def transformer_encoder_layer(src, key_padding_mask, params, *, nhead,
                              activation="relu", norm=True):
    """src: (L, B, E) f32 (seq-first like PyTorch); key_padding_mask: (B, L) bool.

    Returns (out (L, B, E), attn_map (B, L, L) head-averaged)."""
    L, B, E = src.shape
    H = nhead
    dh = E // H
    M = B * L

    # batch-major rows: attention output reshapes into rows with no transpose.
    x = src.transpose(1, 0, 2).reshape(M, E).astype(jnp.float32)     # (B*L, E)

    # ---- QKV projection (one fused matmul, weights broadcast over the grid) ----
    qkv = _linear(x, params["in_proj_weight"].T, params["in_proj_bias"])  # (M, 3E)
    qkv = qkv.reshape(B, L, 3, H, dh)
    q = qkv[:, :, 0].transpose(0, 2, 1, 3)    # (B, H, L, dh)
    k = qkv[:, :, 1].transpose(0, 2, 1, 3)
    v = qkv[:, :, 2].transpose(0, 2, 1, 3)

    # key padding mask -> additive bias (True = masked out)
    mask_bias = jnp.where(key_padding_mask, -1e30, 0.0).astype(jnp.float32)
    mask_bias = mask_bias.reshape(B, 1, L)

    attn_out, attn_map = _mha_attention(q, k, v, mask_bias)   # (B,L,E), (B,L,L)
    attn_flat = attn_out.reshape(M, E)                         # batch-major rows

    # ---- out-proj + residual + norm1 (fused) ----
    x1 = _proj_residual_ln(attn_flat, params["out_proj_weight"].T,
                           params["out_proj_bias"], x,
                           params["norm1_weight"], params["norm1_bias"],
                           apply_norm=norm)

    # ---- MLP + residual + norm2 (fused) ----
    out = _ffn_residual_ln(x1, params["linear1_weight"].T, params["linear1_bias"],
                           params["linear2_weight"].T, params["linear2_bias"],
                           params["norm2_weight"], params["norm2_bias"],
                           activation=activation, apply_norm=norm)

    return out.reshape(B, L, E).transpose(1, 0, 2), attn_map


# ----------------------------------------------------------------------------
# pure-JAX reference (same math, for validation)
# ----------------------------------------------------------------------------
def _reference(src, mask, p, nhead, activation="relu", norm=True, eps=1e-5):
    L, B, E = src.shape
    H = nhead
    dh = E // H
    qkv = src @ p["in_proj_weight"].T + p["in_proj_bias"]
    q, k, v = jnp.split(qkv, 3, axis=-1)

    def heads(t):
        return t.reshape(L, B, H, dh).transpose(1, 2, 0, 3)

    q, k, v = heads(q), heads(k), heads(v)
    s = jnp.einsum("bhld,bhmd->bhlm", q, k) / jnp.sqrt(jnp.float32(dh))
    s = s + jnp.where(mask, -1e30, 0.0)[:, None, None, :]
    pw = jax.nn.softmax(s, axis=-1)
    attn_map = pw.mean(axis=1)
    o = jnp.einsum("bhlm,bhmd->bhld", pw, v)
    o = o.transpose(2, 0, 1, 3).reshape(L, B, E)
    src2 = o @ p["out_proj_weight"].T + p["out_proj_bias"]

    def ln(z, g, b):
        mu = z.mean(-1, keepdims=True)
        zc = z - mu
        var = (zc * zc).mean(-1, keepdims=True)
        return zc * lax.rsqrt(var + eps) * g + b

    x = src + src2
    if norm:
        x = ln(x, p["norm1_weight"], p["norm1_bias"])
    h = x @ p["linear1_weight"].T + p["linear1_bias"]
    h = jnp.maximum(h, 0.0) if activation == "relu" else jax.nn.gelu(h)
    y = h @ p["linear2_weight"].T + p["linear2_bias"]
    x = x + y
    if norm:
        x = ln(x, p["norm2_weight"], p["norm2_bias"])
    return x, attn_map


if __name__ == "__main__":
    # small shapes consistent with the module: seq=8, batch=2, hidden=32,
    # nhead=4 (head_dim=8), mlp=64
    L, B, E, H, F_MLP = 8, 2, 32, 4, 64

    keys = jax.random.split(jax.random.PRNGKey(0), 16)

    def rnd(key, shape, scale=0.1):
        return scale * jax.random.normal(key, shape, dtype=jnp.float32)

    params = {
        "in_proj_weight":  rnd(keys[0], (3 * E, E)),
        "in_proj_bias":    rnd(keys[1], (3 * E,)),
        "out_proj_weight": rnd(keys[2], (E, E)),
        "out_proj_bias":   rnd(keys[3], (E,)),
        "linear1_weight":  rnd(keys[4], (F_MLP, E)),
        "linear1_bias":    rnd(keys[5], (F_MLP,)),
        "linear2_weight":  rnd(keys[6], (E, F_MLP)),
        "linear2_bias":    rnd(keys[7], (E,)),
        "norm1_weight":    1.0 + rnd(keys[8], (E,)),
        "norm1_bias":      rnd(keys[9], (E,)),
        "norm2_weight":    1.0 + rnd(keys[10], (E,)),
        "norm2_bias":      rnd(keys[11], (E,)),
    }

    src = jax.random.normal(keys[12], (L, B, E), dtype=jnp.float32)
    # key_padding_mask: True = ignore that key (last 2 positions of batch 1 padded)
    mask = jnp.zeros((B, L), dtype=bool).at[1, -2:].set(True)

    out, attn_map = transformer_encoder_layer(src, mask, params, nhead=H,
                                              activation="relu", norm=True)
    out = jax.block_until_ready(out)
    attn_map = jax.block_until_ready(attn_map)

    ref_out, ref_attn = _reference(src, mask, params, H)

    assert out.shape == (L, B, E) and attn_map.shape == (B, L, L)
    assert jnp.allclose(out, ref_out, rtol=2e-4, atol=2e-4), \
        float(jnp.max(jnp.abs(out - ref_out)))
    assert jnp.allclose(attn_map, ref_attn, rtol=2e-4, atol=2e-4), \
        float(jnp.max(jnp.abs(attn_map - ref_attn)))

    print("KERNEL_OK")
</pallas_src>

<mosaic_0001>
module attributes {stable_mosaic.version = 11 : i64} {
  func.func @_linear_kernel(%arg0: i32, %arg1: memref<16x32xf32, #tpu.memory_space<vmem>>, %arg2: memref<32x96xf32, #tpu.memory_space<vmem>>, %arg3: memref<1x96xf32, #tpu.memory_space<vmem>>, %arg4: memref<16x96xf32, #tpu.memory_space<vmem>>) attributes {dimension_semantics = [#tpu.dimension_semantics<parallel>], iteration_bounds = array<i64: 1>, scalar_prefetch = 0 : i64, scratch_operands = 0 : i64, tpu.core_type = #tpu.core_type<tc>, window_params = [{transform_indices = @transform_0, window_bounds = array<i64: 16, 32>}, {pipeline_mode = #tpu.pipeline_mode<synchronous>, transform_indices = @transform_1, window_bounds = array<i64: 32, 96>}, {pipeline_mode = #tpu.pipeline_mode<synchronous>, transform_indices = @transform_2, window_bounds = array<i64: 1, 96>}, {transform_indices = @transform_3, window_bounds = array<i64: 16, 96>}]} {
    %c0 = arith.constant 0 : index
    %c0_0 = arith.constant 0 : index
    %0 = vector.load %arg1[%c0, %c0_0] : memref<16x32xf32, #tpu.memory_space<vmem>>, vector<16x32xf32>
    %c0_1 = arith.constant 0 : index
    %c0_2 = arith.constant 0 : index
    %1 = vector.load %arg2[%c0_1, %c0_2] : memref<32x96xf32, #tpu.memory_space<vmem>>, vector<32x96xf32>
    %cst = arith.constant dense<0.000000e+00> : vector<16x96xf32>
    %2 = tpu.matmul %0, %1, %cst {dimension_numbers = #tpu.dot_dimension_numbers<[1], [0], [0], [1], [0, 0, 1, 1], [], []>} : vector<16x32xf32>, vector<32x96xf32>, vector<16x96xf32> -> vector<16x96xf32>
    %c0_3 = arith.constant 0 : index
    %c0_4 = arith.constant 0 : index
    %3 = vector.load %arg3[%c0_3, %c0_4] : memref<1x96xf32, #tpu.memory_space<vmem>>, vector<1x96xf32>
    %4 = vector.broadcast %3 : vector<1x96xf32> to vector<16x96xf32>
    %5 = arith.addf %2, %4 : vector<16x96xf32>
    %c0_5 = arith.constant 0 : index
    %c0_6 = arith.constant 0 : index
    %6 = vector.load %arg4[%c0_5, %c0_6] : memref<16x96xf32, #tpu.memory_space<vmem>>, vector<16x96xf32>
    tpu.vector_store %arg4[%c0_5, %c0_6], %5 {strides = array<i32>} : memref<16x96xf32, #tpu.memory_space<vmem>>, vector<16x96xf32>,
    return
  }
  func.func @transform_0(%arg0: i32) -> (i32, i32) {
    %c0_i32 = arith.constant 0 : i32
    %c0_i32_0 = arith.constant 0 : i32
    return %arg0, %c0_i32 : i32, i32
  }
  func.func @transform_1(%arg0: i32) -> (i32, i32) {
    %c0_i32 = arith.constant 0 : i32
    %c0_i32_0 = arith.constant 0 : i32
    %c0_i32_1 = arith.constant 0 : i32
    return %c0_i32, %c0_i32_0 : i32, i32
  }
  func.func @transform_2(%arg0: i32) -> (i32, i32) {
    %c0_i32 = arith.constant 0 : i32
    %c0_i32_0 = arith.constant 0 : i32
    %c0_i32_1 = arith.constant 0 : i32
    return %c0_i32, %c0_i32_0 : i32, i32
  }
  func.func @transform_3(%arg0: i32) -> (i32, i32) {
    %c0_i32 = arith.constant 0 : i32
    %c0_i32_0 = arith.constant 0 : i32
    return %arg0, %c0_i32 : i32, i32
  }
}

</mosaic_0001>

<llo_original>
// kernel: tpu_custom_call.1
$region0: #{tpu_custom_call.1}
  #allocation0 [shape = 'u32[]', space=smem, size = 0x4, offset = 0x4, fixed_abs, tag = 'smem constant byte address 0x4 - core index']
  #allocation1 [shape = 'u32[72,128]{1,0:T(1,128)}', space=vmem, size = 0x9000, scoped, tag = 'internal scratch']
  %s0 = inlined_call_operand.hbm [shape: f32[16,32], index: 0, kind: input, shape index: {}]
  %s1 = inlined_call_operand.hbm [shape: f32[32,96], index: 1, kind: input, shape index: {}]
  %s2 = inlined_call_operand.vmem [shape: f32[1,96], index: 2, kind: input, shape index: {}]
  %s3 = inlined_call_operand.hbm [shape: f32[16,96], index: 3, kind: output, shape index: {}]
  %s4 = sld [smem:[#allocation0]]
  $region30: #{tpu_custom_call.1} parent=0
    _
  %s6 = ssub.s32 1, %s4
  %s7 = scalar_select 0, %s6, %s4
  $region1: #{tpu_custom_call.1} parent=0
    #allocation2 [shape = 'u8[8192]{0}', space=vmem, size = 0x2000, scoped, tag = 'input window, operand 0, single buffered']
    #allocation3 [shape = 's32[1]{0}', space=sflag, size = 0x4, scoped, tag = 'scoped memory for tpu_custom_call.1']
    #allocation4 [shape = 's32[1]{0}', space=sflag, size = 0x4, scoped, tag = 'scoped memory for tpu_custom_call.1']
    #allocation5 [shape = 'u8[16384]{0}', space=vmem, size = 0x4000, scoped, tag = 'input window, operand 1, single buffered']
    #allocation6 [shape = 's32[1]{0}', space=sflag, size = 0x4, scoped, tag = 'scoped memory for tpu_custom_call.1']
    #allocation7 [shape = 'u8[8192]{0}', space=vmem, size = 0x2000, scoped, tag = 'output window, operand 0, single buffered']
    %8 = vsyncpa [#allocation3], 0
    %9 = vsyncpa [#allocation6], 0
    %10 = vsyncpa [#allocation4], 0
    // Predicated region
    $region2: #{tpu_custom_call.1} parent=1 // pred_check
      _
    $region3: #{tpu_custom_call.1} parent=1 // pred_check_branch
      %12 = sbr.rel (0) target = $region5
    $region4: #{tpu_custom_call.1} parent=1 // pred_region
      %14 = vsyncadd [#allocation3], 0
      %s15 = sshll.u32 %s0, 4
      %s16 = int_to_ptr.hbm [resolvable:$true] %s15
      %s17 = sshll.u32 [#allocation2], 4
      %s18 = int_to_ptr.vmem [resolvable:$true] %s17
      %23 = dma.hbm_to_vmem [thread:$0]  %s16, 256, %s18, [#allocation3], 128, 128, 8
    $region5: #{tpu_custom_call.1} parent=1 // pred_fallthru
      _
    // Predicated region
    $region6: #{tpu_custom_call.1} parent=1 // pred_check
      _
    $region7: #{tpu_custom_call.1} parent=1 // pred_check_branch
      %25 = sbr.rel (0) target = $region9
    $region8: #{tpu_custom_call.1} parent=1 // pred_region
      %27 = vsyncadd [#allocation6], 0
      %s28 = sshll.u32 %s1, 4
      %s29 = int_to_ptr.hbm [resolvable:$true] %s28
      %s30 = sshll.u32 [#allocation5], 4
      %s31 = int_to_ptr.vmem [resolvable:$true] %s30
      %36 = dma.hbm_to_vmem [thread:$0]  %s29, 512, %s31, [#allocation6], 128, 128, 8
    $region9: #{tpu_custom_call.1} parent=1 // pred_fallthru
      _
    // Predicated region
    $region10: #{tpu_custom_call.1} parent=1 // pred_check
      _
    $region11: #{tpu_custom_call.1} parent=1 // pred_check_branch
      %38 = sbr.rel (0) target = $region13
    $region12: #{tpu_custom_call.1} parent=1 // pred_region
      _
    $region13: #{tpu_custom_call.1} parent=1 // pred_fallthru
      _
    // Predicated region
    $region14: #{tpu_custom_call.1} parent=1 // pred_check
      _
    $region15: #{tpu_custom_call.1} parent=1 // pred_check_branch
      %40 = sbr.rel (0) target = $region17
    $region16: #{tpu_custom_call.1} parent=1 // pred_region
      %42 = dma.done [#allocation3], 256
    $region17: #{tpu_custom_call.1} parent=1 // pred_fallthru
      _
    // Predicated region
    $region18: #{tpu_custom_call.1} parent=1 // pred_check
      _
    $region19: #{tpu_custom_call.1} parent=1 // pred_check_branch
      %44 = sbr.rel (0) target = $region21
    $region20: #{tpu_custom_call.1} parent=1 // pred_region
      %46 = dma.done [#allocation6], 512
    $region21: #{tpu_custom_call.1} parent=1 // pred_fallthru
      _
    %v47 = vld [vmem:[#allocation2] sm:$0xff]
    %v48 = vld [vmem:[#allocation2 + $0x8] sm:$0xff]
    %v49 = vld [vmem:[#allocation5] sm:$0xff]
    %v50 = vld [vmem:[#allocation5 + $0x8] sm:$0xff]
    %v51 = vld [vmem:[#allocation5 + $0x10] sm:$0xff]
    %v52 = vld [vmem:[#allocation5 + $0x18] sm:$0xff]
    %v53 = vld [vmem:[%s2] sm:$0x1]
    %v55 = vperm.slane %v53, 0
    %vm57 = vcmask 261120
    %v59 = vsel %vm57, %v47, 0
    %v62 = vsel %vm57, %v48, 0
    %64 = vmatpush.msra.mxu0 0.0
    %65 = vmatpush.msra.mxu0 0.0
    %66 = vmatpush.msra.mxu0 0.0
    %67 = vmatpush.msra.mxu0 0.0
    %68 = vmatpush.msra.mxu0 0.0
    %69 = vmatpush.msra.mxu0 0.0
    %70 = vmatpush.msra.mxu0 0.0
    %71 = vmatpush.msra.mxu0 0.0
    %72 = vmatpush.msra.mxu0 0.0
    %73 = vmatpush.msra.mxu0 0.0
    %74 = vmatpush.msra.mxu0 0.0
    %75 = vmatpush.msra.mxu0 0.0
    %76 = vmatpush.msra.mxu0 %v52
    %77 = vmatpush.msra.mxu0 %v51
    %78 = vmatpush.msra.mxu0 %v50
    %79 = vmatpush.msra.mxu0 %v49
    %80 = vmatmul.f32.gmra.mxu0 %v59
    %v81 = vpop.f32.mrf.mxu0
    %v82 = vadd.f32 %v55, %v81
    %83 = vmatmul.f32.gmra.mxu0 %v62
    %v84 = vpop.f32.mrf.mxu0
    %v85 = vadd.f32 %v55, %v84
    %86 = vdwg.mxu0
    %vm87 = vcmask 785408
    %88 = vst.msk [vmem:[#allocation7] sm:$0xff] %vm87, %v82
    %89 = vst.msk [vmem:[#allocation7 + $0x8] sm:$0xff] %vm87, %v85
    // Predicated region
    $region22: #{tpu_custom_call.1} parent=1 // pred_check
      _
    $region23: #{tpu_custom_call.1} parent=1 // pred_check_branch
      %91 = sbr.rel (0) target = $region25
    $region24: #{tpu_custom_call.1} parent=1 // pred_region
      %93 = vsyncadd [#allocation4], 0
      %s94 = sshll.u32 [#allocation7], 4
      %s95 = int_to_ptr.vmem [resolvable:$true] %s94
      %s96 = sshll.u32 %s3, 4
      %s97 = int_to_ptr.hbm [resolvable:$true] %s96
      %102 = dma.vmem_to_hbm [thread:$0]  %s95, 256, %s97, [#allocation4], 128, 128, 8
    $region25: #{tpu_custom_call.1} parent=1 // pred_fallthru
      _
    // Predicated region
    $region26: #{tpu_custom_call.1} parent=1 // pred_check
      _
    $region27: #{tpu_custom_call.1} parent=1 // pred_check_branch
      %104 = sbr.rel (0) target = $region29
    $region28: #{tpu_custom_call.1} parent=1 // pred_region
      %106 = dma.done [#allocation4], 256
    $region29: #{tpu_custom_call.1} parent=1 // pred_fallthru
      _
    %107 = vsyncpa [#allocation3], 1
    %108 = vsyncpa [#allocation6], 1
    %109 = vsyncpa [#allocation4], 1

</llo_original>
